<compile_context>
chip_gen: v6e
topology: v6e:2x2x1
jax: 0.10.0
libtpu: 0.0.40
codegen_flags: <defaults>
</compile_context>

<pallas_src>
import functools

import jax
import jax.numpy as jnp
from jax.experimental import pallas as pl
from jax.experimental.pallas import tpu as pltpu


def _dice_conf_kernel(logits_ref, labels_ref, conf_ref, *,
                      n_classes, tile_hw, hw, upcast_to_f32, needs_mask):
    # logits_ref: (C, T) logits, labels_ref: (1, T) int32,
    # conf_ref:   (C, C) f32 per-batch confusion-matrix accumulator (resident
    #             across the spatial grid axis; written back at batch change).
    @pl.when(pl.program_id(1) == 0)
    def _():
        conf_ref[...] = jnp.zeros_like(conf_ref)

    logits = logits_ref[...]
    if upcast_to_f32:
        # Only for bf16 inputs on v5e (no bf16 VALU there); v6e/v7x stay bf16.
        logits = logits.astype(jnp.float32)
    labels = labels_ref[...]                                   # (1, T) int32

    C = n_classes
    cls = jax.lax.broadcasted_iota(jnp.int32, (C, tile_hw), 0)  # (C, T)

    # argmax over the class (sublane) axis, first-occurrence tie-break.
    m = jnp.max(logits, axis=0, keepdims=True)                  # (1, T)
    is_max = logits == m                                        # (C, T)
    pred = jnp.min(jnp.where(is_max, cls, C), axis=0, keepdims=True)  # (1, T)

    if needs_mask:
        # Ragged tail: push pred to the sentinel class C on invalid lanes.
        # A zero pred one-hot column zeroes the whole conf contribution of that
        # lane (tp, pred_count and label_count alike), so labels need no mask.
        lane = jax.lax.broadcasted_iota(jnp.int32, (1, tile_hw), 1)
        valid = (pl.program_id(1) * tile_hw + lane) < hw        # (1, T)
        pred = jnp.where(valid, pred, C)

    pred_oh = (cls == pred).astype(jnp.bfloat16)                # (C, T)
    label_oh = (cls == labels).astype(jnp.bfloat16)             # (C, T)

    # conf[p, l] += sum_t pred_oh[p, t] * label_oh[l, t]   (MXU, f32 accumulate)
    conf_ref[...] += jax.lax.dot_general(
        pred_oh, label_oh,
        dimension_numbers=(((1,), (1,)), ((), ())),
        preferred_element_type=jnp.float32)


def _needs_f32_compute(logit_dtype) -> bool:
    """Upcast sub-f32 logits only on v5-class chips (no bf16 VALU)."""
    if jnp.dtype(logit_dtype) == jnp.dtype(jnp.float32):
        return False
    try:
        kind = jax.devices()[0].device_kind.lower()
    except Exception:
        return True  # unknown device: be safe
    return "v5" in kind


def _pick_tile_hw(n_classes, hw, logit_dtype,
                  *, vmem_input_budget=4 * 1024 * 1024):
    """Largest 128-aligned spatial tile whose single-buffered input footprint
    (sublane-padded logits + sublane-padded int32 labels) fits the budget."""
    itemsize = jnp.dtype(logit_dtype).itemsize
    sublane_pack = max(8, 32 // max(itemsize, 1))        # f32:8, bf16:16, int8:32
    pad_c = -(-n_classes // sublane_pack) * sublane_pack
    bytes_per_lane = pad_c * itemsize + 8 * 4            # logits + padded labels
    tile = vmem_input_budget // bytes_per_lane
    tile = max(128, (tile // 128) * 128)
    if hw <= tile:
        return hw                                        # full row: no tail mask
    return tile


def _dice_confusion(logits_bcx, labels_b1x):
    """logits: (B, C, HW) float; labels: (B, 1, HW) int32 -> (B, C, C) f32."""
    B, C, HW = logits_bcx.shape
    tile_hw = _pick_tile_hw(C, HW, logits_bcx.dtype)
    n_tiles = pl.cdiv(HW, tile_hw)
    needs_mask = (HW % tile_hw) != 0
    upcast = _needs_f32_compute(logits_bcx.dtype)

    kernel = functools.partial(
        _dice_conf_kernel, n_classes=C, tile_hw=tile_hw, hw=HW,
        upcast_to_f32=upcast, needs_mask=needs_mask)

    return pl.pallas_call(
        kernel,
        out_shape=jax.ShapeDtypeStruct((B, C, C), jnp.float32),
        grid_spec=pltpu.PrefetchScalarGridSpec(
            num_scalar_prefetch=0,
            grid=(B, n_tiles),
            in_specs=[
                # Native NCHW: class on sublanes, spatial on lanes (lane-dense).
                pl.BlockSpec((pl.Squeezed(), C, tile_hw), lambda b, j: (b, 0, j)),
                pl.BlockSpec((pl.Squeezed(), 1, tile_hw), lambda b, j: (b, 0, j)),
            ],
            # Per-batch confusion matrix, resident across the spatial axis.
            out_specs=pl.BlockSpec((pl.Squeezed(), C, C), lambda b, j: (b, 0, 0)),
        ),
        compiler_params=pltpu.CompilerParams(
            # Batch axis sharded across TensorCores (megacore on v7x);
            # spatial axis is the sequential reduction.
            dimension_semantics=("parallel", "arbitrary"),
            # Explicit budget: ~2x4 MiB double-buffered inputs + temporaries,
            # safe on v5e/v6e (128 MiB phys) and v7x (64 MiB phys).
            vmem_limit_bytes=32 * 1024 * 1024,
        ),
    )(logits_bcx, labels_b1x)


def segmentation_dice_coefficient(true_masks, out):
    """true_masks: [B, H, W] int; out: [B, C, H, W] logits -> dice: (C,) f32."""
    B, C, H, W = out.shape
    HW = H * W
    # Pure reshapes: no transpose, no concat, no dtype upcast of the HBM input.
    logits = out.reshape(B, C, HW)
    labels = true_masks.reshape(B, 1, HW).astype(jnp.int32)

    conf_b = _dice_confusion(logits, labels)       # (B, C, C) per-batch counts
    conf = jnp.sum(conf_b, axis=0)                 # sum counts BEFORE dividing
    tp = jnp.diagonal(conf)                        # (C,)
    pred_count = jnp.sum(conf, axis=1)             # (C,)
    label_count = jnp.sum(conf, axis=0)            # (C,)
    # Matches the PyTorch/numpy module exactly: no epsilon (0/0 -> NaN there too).
    return 2.0 * tp / (pred_count + label_count)


if __name__ == "__main__":
    key = jax.random.PRNGKey(0)
    k1, k2 = jax.random.split(key)

    B, C, H, W = 2, 4, 16, 16
    out = jax.random.normal(k1, (B, C, H, W), dtype=jnp.float32)
    true_masks = jax.random.randint(k2, (B, H, W), 0, C, dtype=jnp.int32)

    dice = segmentation_dice_coefficient(true_masks, out)
    jax.block_until_ready(dice)

    # Plain-JAX reference matching the PyTorch module.
    probs = jnp.transpose(out, (0, 2, 3, 1)).reshape(-1, C)
    pred = jnp.argmax(probs, axis=1)
    tm = true_masks.reshape(-1)
    ref_list = []
    for c in range(C):
        tp_c = jnp.sum((pred == c) & (tm == c)).astype(jnp.float32)
        div_c = (jnp.sum(pred == c) + jnp.sum(tm == c)).astype(jnp.float32)
        ref_list.append(2.0 * tp_c / div_c)
    ref = jnp.stack(ref_list)

    assert dice.shape == (C,)
    assert jnp.allclose(dice, ref, atol=1e-6, rtol=1e-6), (dice, ref)

    print("KERNEL_OK")
</pallas_src>

<mosaic_0001>
module attributes {stable_mosaic.version = 11 : i64} {
  func.func @_dice_conf_kernel(%arg0: i32, %arg1: i32, %arg2: memref<1x4x256xf32, #tpu.memory_space<vmem>>, %arg3: memref<1x1x256xi32, #tpu.memory_space<vmem>>, %arg4: memref<1x4x4xf32, #tpu.memory_space<vmem>>) attributes {dimension_semantics = [#tpu.dimension_semantics<parallel>, #tpu.dimension_semantics<arbitrary>], iteration_bounds = array<i64: 2, 1>, scalar_prefetch = 0 : i64, scratch_operands = 0 : i64, tpu.core_type = #tpu.core_type<tc>, window_params = [{transform_indices = @transform_0, window_bounds = array<i64: 1, 4, 256>}, {transform_indices = @transform_1, window_bounds = array<i64: 1, 1, 256>}, {transform_indices = @transform_2, window_bounds = array<i64: 1, 4, 4>}]} {
    %c0_i32 = arith.constant 0 : i32
    %0 = arith.cmpi eq, %arg1, %c0_i32 : i32
    %1 = arith.extui %0 : i1 to i32
    %c0_i32_0 = arith.constant 0 : i32
    %2 = arith.cmpi ne, %1, %c0_i32_0 : i32
    scf.if %2 {
      %cst_14 = arith.constant 0.000000e+00 : f32
      %33 = vector.broadcast %cst_14 : f32 to vector<4x4xf32>
      %c0_15 = arith.constant 0 : index
      %c0_16 = arith.constant 0 : index
      %c0_17 = arith.constant 0 : index
      %34 = vector.load %arg4[%c0_15, %c0_16, %c0_17] : memref<1x4x4xf32, #tpu.memory_space<vmem>>, vector<1x4x4xf32>
      %35 = vector.shape_cast %34 : vector<1x4x4xf32> to vector<4x4xf32>
      %36 = vector.shape_cast %33 : vector<4x4xf32> to vector<1x4x4xf32>
      tpu.vector_store %arg4[%c0_15, %c0_16, %c0_17], %36 {strides = array<i32>} : memref<1x4x4xf32, #tpu.memory_space<vmem>>, vector<1x4x4xf32>,
    } else {
    }
    %c0 = arith.constant 0 : index
    %c0_1 = arith.constant 0 : index
    %c0_2 = arith.constant 0 : index
    %3 = vector.load %arg2[%c0, %c0_1, %c0_2] : memref<1x4x256xf32, #tpu.memory_space<vmem>>, vector<1x4x256xf32>
    %4 = vector.shape_cast %3 : vector<1x4x256xf32> to vector<4x256xf32>
    %c0_3 = arith.constant 0 : index
    %c0_4 = arith.constant 0 : index
    %c0_5 = arith.constant 0 : index
    %5 = vector.load %arg3[%c0_3, %c0_4, %c0_5] : memref<1x1x256xi32, #tpu.memory_space<vmem>>, vector<1x1x256xi32>
    %6 = vector.shape_cast %5 : vector<1x1x256xi32> to vector<1x256xi32>
    %7 = tpu.iota {dimensions = array<i32: 0>} : vector<4x256xi32>
    %cst = arith.constant dense<0xFF800000> : vector<256xf32>
    %8 = vector.multi_reduction <maximumf>, %4, %cst [0] : vector<4x256xf32> to vector<256xf32>
    %9 = vector.shape_cast %8 : vector<256xf32> to vector<1x256xf32>
    %10 = vector.broadcast %9 : vector<1x256xf32> to vector<4x256xf32>
    %11 = arith.cmpf oeq, %4, %10 : vector<4x256xf32>
    %c4_i32 = arith.constant 4 : i32
    %12 = vector.broadcast %c4_i32 : i32 to vector<4x256xi32>
    %13 = arith.select %11, %7, %12 : vector<4x256xi1>, vector<4x256xi32>
    %cst_6 = arith.constant dense<2147483647> : vector<256xi32>
    %14 = vector.multi_reduction <minsi>, %13, %cst_6 [0] : vector<4x256xi32> to vector<256xi32>
    %15 = vector.shape_cast %14 : vector<256xi32> to vector<1x256xi32>
    %16 = vector.broadcast %15 : vector<1x256xi32> to vector<4x256xi32>
    %17 = arith.cmpi eq, %7, %16 : vector<4x256xi32>
    %18 = arith.extui %17 : vector<4x256xi1> to vector<4x256xi32>
    %19 = arith.sitofp %18 : vector<4x256xi32> to vector<4x256xf32>
    %20 = arith.truncf %19 : vector<4x256xf32> to vector<4x256xbf16>
    %21 = vector.broadcast %6 : vector<1x256xi32> to vector<4x256xi32>
    %22 = arith.cmpi eq, %7, %21 : vector<4x256xi32>
    %23 = arith.extui %22 : vector<4x256xi1> to vector<4x256xi32>
    %24 = arith.sitofp %23 : vector<4x256xi32> to vector<4x256xf32>
    %25 = arith.truncf %24 : vector<4x256xf32> to vector<4x256xbf16>
    %c0_7 = arith.constant 0 : index
    %c0_8 = arith.constant 0 : index
    %c0_9 = arith.constant 0 : index
    %26 = vector.load %arg4[%c0_7, %c0_8, %c0_9] : memref<1x4x4xf32, #tpu.memory_space<vmem>>, vector<1x4x4xf32>
    %27 = vector.shape_cast %26 : vector<1x4x4xf32> to vector<4x4xf32>
    %cst_10 = arith.constant dense<0.000000e+00> : vector<4x4xf32>
    %28 = tpu.matmul %20, %25, %cst_10 {dimension_numbers = #tpu.dot_dimension_numbers<[1], [1], [0], [0], [0, 0, 1, 0], [], []>} : vector<4x256xbf16>, vector<4x256xbf16>, vector<4x4xf32> -> vector<4x4xf32>
    %29 = arith.addf %27, %28 : vector<4x4xf32>
    %c0_11 = arith.constant 0 : index
    %c0_12 = arith.constant 0 : index
    %c0_13 = arith.constant 0 : index
    %30 = vector.load %arg4[%c0_11, %c0_12, %c0_13] : memref<1x4x4xf32, #tpu.memory_space<vmem>>, vector<1x4x4xf32>
    %31 = vector.shape_cast %30 : vector<1x4x4xf32> to vector<4x4xf32>
    %32 = vector.shape_cast %29 : vector<4x4xf32> to vector<1x4x4xf32>
    tpu.vector_store %arg4[%c0_11, %c0_12, %c0_13], %32 {strides = array<i32>} : memref<1x4x4xf32, #tpu.memory_space<vmem>>, vector<1x4x4xf32>,
    return
  }
  func.func @transform_0(%arg0: i32, %arg1: i32) -> (i32, i32, i32) {
    %c0_i32 = arith.constant 0 : i32
    %c0_i32_0 = arith.constant 0 : i32
    return %arg0, %c0_i32, %arg1 : i32, i32, i32
  }
  func.func @transform_1(%arg0: i32, %arg1: i32) -> (i32, i32, i32) {
    %c0_i32 = arith.constant 0 : i32
    %c0_i32_0 = arith.constant 0 : i32
    return %arg0, %c0_i32, %arg1 : i32, i32, i32
  }
  func.func @transform_2(%arg0: i32, %arg1: i32) -> (i32, i32, i32) {
    %c0_i32 = arith.constant 0 : i32
    %c0_i32_0 = arith.constant 0 : i32
    %c0_i32_1 = arith.constant 0 : i32
    return %arg0, %c0_i32, %c0_i32_0 : i32, i32, i32
  }
}

</mosaic_0001>

<llo_original>
// kernel: tpu_custom_call.1
$region0: #{tpu_custom_call.1}
  #allocation0 [shape = 'u32[]', space=smem, size = 0x4, offset = 0x4, fixed_abs, tag = 'smem constant byte address 0x4 - core index']
  #allocation1 [shape = 'u32[144,128]{1,0:T(1,128)}', space=vmem, size = 0x12000, scoped, tag = 'internal scratch']
  %s0 = inlined_call_operand.hbm [shape: f32[2,4,256], index: 0, kind: input, shape index: {}]
  %s1 = inlined_call_operand.hbm [shape: s32[2,1,256], index: 1, kind: input, shape index: {}]
  %s2 = inlined_call_operand.hbm [shape: f32[2,4,4], index: 2, kind: output, shape index: {}]
  %s3 = sld [smem:[#allocation0]]
  $region53: #{tpu_custom_call.1} parent=0
    _
  %s5 = ssub.s32 1, %s3
  %s6 = scalar_select 0, %s5, %s3
  $region1: #{tpu_custom_call.1} parent=0
    #allocation2 [shape = 'u8[8192]{0}', space=vmem, size = 0x2000, scoped, tag = 'input window, operand 0']
    #allocation3 [shape = 's32[2]{0}', space=sflag, size = 0x8, scoped, tag = 'scoped memory for tpu_custom_call.1']
    #allocation4 [shape = 's32[2]{0}', space=sflag, size = 0x8, scoped, tag = 'scoped memory for tpu_custom_call.1']
    #allocation5 [shape = 'u8[2048]{0}', space=vmem, size = 0x800, scoped, tag = 'input window, operand 1']
    #allocation6 [shape = 's32[2]{0}', space=sflag, size = 0x8, scoped, tag = 'scoped memory for tpu_custom_call.1']
    #allocation7 [shape = 'u8[4096]{0}', space=vmem, size = 0x1000, scoped, tag = 'output window, operand 0']
    %7 = vsyncpa [#allocation3], 0
    %s8 = scalar_lea.sflag [#allocation3], 1
    %9 = vsyncpa %s8, 0
    %10 = vsyncpa [#allocation6], 0
    %s11 = scalar_lea.sflag [#allocation6], 1
    %12 = vsyncpa %s11, 0
    %13 = vsyncpa [#allocation4], 0
    %s14 = scalar_lea.sflag [#allocation4], 1
    %15 = vsyncpa %s14, 0
    loop: start=0, step=1, limit=4
    $region2: #{tpu_custom_call.1} parent=1 // loop_pre_header
      _
    $region3: #{tpu_custom_call.1} parent=1 // loop_header
      %s17 = sphi 0, %s21
      %p18 = scmp.ge.s32.totalorder %s17, 4
      %s24 = sphi 0, %s36
      %s25 = sphi 0, %s32
      %s26 = sphi 0, %s24
      %s27 = sphi 0, %s25
      %s28 = sphi 0, %s26
      %s29 = sphi 0, %s27
      %s41 = sphi 0, %s43
      %s44 = sphi 0, %s41
      %s45 = sphi 0, %s44
      %s61 = sphi 0, %s45
      %s69 = sphi 0, %s71
      %s72 = sphi 0, %s69
      %s73 = sphi 0, %s72
      %s89 = sphi 0, %s73
      %s95 = sphi 0, %s97
      %s98 = sphi 0, %s95
      %s99 = sphi 0, %s98
      %s115 = sphi 0, %s99
    $region4: #{tpu_custom_call.1} parent=1 // loop_header_branch
      %20 = sbr.rel (%p18) target = $region8
    $region5: #{tpu_custom_call.1} parent=1 // loop_body
      %s22 = ssub.s32 %s17, 1
      %s23 = ssub.s32 %s17, 2
      %s30 = sadd.s32 1, %s25
      %p31 = scmp.ge.s32.totalorder %s30, 1
      %s32 = scalar_select %p31, 0, %s30
      %s33 = sadd.s32 1, %s24
      %s34 = scalar_select %p31, %s33, %s24
      %p35 = scmp.ge.s32.totalorder %s34, 2
      %s36 = scalar_select %p35, 0, %s34
      %s37 = ssub.s32 %s24, %s36
      %s38 = ssub.s32 %s25, %s32
      %s39 = sor.u32 %s37, %s38
      %p40 = scmp.eq.s32.totalorder %s39, 0
      %s42 = sadd.s32 %s41, 1
      %s43 = scalar_select %p40, %s41, %s42
      %p46 = pneg %p40
      %p47 = scmp.eq.s32.totalorder %s17, 1
      %p48 = por %p46, %p47
      %p49 = scmp.ne.s32.totalorder %s41, %s44
      %p50 = scmp.eq.s32.totalorder %s17, 0
      %p51 = por %p49, %p50
      %p52 = scmp.ne.s32.totalorder %s41, %s44
      %p53 = scmp.eq.s32.totalorder %s22, 1
      %p54 = por %p52, %p53
      %p55 = scmp.ne.s32.totalorder %s44, %s45
      %p56 = scmp.eq.s32.totalorder %s22, 0
      %p57 = por %p55, %p56
      %p58 = scmp.ne.s32.totalorder %s44, %s45
      %p59 = scmp.eq.s32.totalorder %s23, 1
      %p60 = por %p58, %p59
      %p62 = scmp.ne.s32.totalorder %s45, %s61
      %p63 = scmp.eq.s32.totalorder %s23, 0
      %p64 = por %p62, %p63
      %s65 = ssub.s32 %s24, %s36
      %s66 = ssub.s32 %s25, %s32
      %s67 = sor.u32 %s65, %s66
      %p68 = scmp.eq.s32.totalorder %s67, 0
      %s70 = sadd.s32 %s69, 1
      %s71 = scalar_select %p68, %s69, %s70
      %p74 = pneg %p68
      %p75 = scmp.eq.s32.totalorder %s17, 1
      %p76 = por %p74, %p75
      %p77 = scmp.ne.s32.totalorder %s69, %s72
      %p78 = scmp.eq.s32.totalorder %s17, 0
      %p79 = por %p77, %p78
      %p80 = scmp.ne.s32.totalorder %s69, %s72
      %p81 = scmp.eq.s32.totalorder %s22, 1
      %p82 = por %p80, %p81
      %p83 = scmp.ne.s32.totalorder %s72, %s73
      %p84 = scmp.eq.s32.totalorder %s22, 0
      %p85 = por %p83, %p84
      %p86 = scmp.ne.s32.totalorder %s72, %s73
      %p87 = scmp.eq.s32.totalorder %s23, 1
      %p88 = por %p86, %p87
      %p90 = scmp.ne.s32.totalorder %s73, %s89
      %p91 = scmp.eq.s32.totalorder %s23, 0
      %p92 = por %p90, %p91
      %s93 = ssub.s32 %s24, %s36
      %p94 = scmp.eq.s32.totalorder %s93, 0
      %s96 = sadd.s32 %s95, 1
      %s97 = scalar_select %p94, %s95, %s96
      %p100 = pneg %p94
      %p101 = scmp.eq.s32.totalorder %s17, 1
      %p102 = por %p100, %p101
      %p103 = scmp.ne.s32.totalorder %s95, %s98
      %p104 = scmp.eq.s32.totalorder %s17, 0
      %p105 = por %p103, %p104
      %p106 = scmp.ne.s32.totalorder %s95, %s98
      %p107 = scmp.eq.s32.totalorder %s22, 1
      %p108 = por %p106, %p107
      %p109 = scmp.ne.s32.totalorder %s98, %s99
      %p110 = scmp.eq.s32.totalorder %s22, 0
      %p111 = por %p109, %p110
      %p112 = scmp.ne.s32.totalorder %s98, %s99
      %p113 = scmp.eq.s32.totalorder %s23, 1
      %p114 = por %p112, %p113
      %p116 = scmp.ne.s32.totalorder %s99, %s115
      %p117 = scmp.eq.s32.totalorder %s23, 0
      %p118 = por %p116, %p117
      %p119 = scmp.le.s32.totalorder 1, %s17
      %p120 = scmp.lt.s32.totalorder %s17, 3
      %p121 = pnand %p119, %p120
      %p122 = pneg %p121
      // Predicated region
      $region9: #{tpu_custom_call.1} parent=5 // pred_check
        _
      $region10: #{tpu_custom_call.1} parent=5 // pred_check_branch
        %124 = sbr.rel (%p121) target = $region12
      $region11: #{tpu_custom_call.1} parent=5 // pred_region
        %s125 = ssub.s32 %s17, 1
      $region12: #{tpu_custom_call.1} parent=5 // pred_fallthru
        _
      %p126 = scmp.lt.s32.totalorder %s17, 2
      // Predicated region
      $region13: #{tpu_custom_call.1} parent=5 // pred_check
        %p127 = pneg %p126
      $region14: #{tpu_custom_call.1} parent=5 // pred_check_branch
        %129 = sbr.rel (%p127) target = $region16
      $region15: #{tpu_custom_call.1} parent=5 // pred_region
        // Predicated region
        $region17: #{tpu_custom_call.1} parent=15 // pred_check
          %p130 = pneg %p51
        $region18: #{tpu_custom_call.1} parent=15 // pred_check_branch
          %132 = sbr.rel (%p130) target = $region20
        $region19: #{tpu_custom_call.1} parent=15 // pred_region
          %s133 = sand.u32 %s41, 1
          %s134 = scalar_lea.sflag [#allocation3], %s133
          %s135 = sand.u32 %s41, 1
          %s136 = smul.addr %s135, 8
          %s137 = scalar_lea.vmem [#allocation2], %s136
          %s138 = smul.u32 2, %s25
          %s140 = ssub.s32 128, 128
          %141 = vsyncadd %s134, %s140
          %s142 = smul.addr %s24, 2
          %s143 = sadd.s32 %s138, %s142
          %s144 = smul.addr %s143, 64
          %s145 = scalar_lea.hbm %s0, %s144
          %s147 = sshll.u32 %s137, 4
          %s148 = int_to_ptr.vmem [resolvable:$true] %s147
          %150 = dma.hbm_to_vmem [thread:$0]  %s145, 128, %s148, %s134
        $region20: #{tpu_custom_call.1} parent=15 // pred_fallthru
          _
        // Predicated region
        $region21: #{tpu_custom_call.1} parent=15 // pred_check
          %p151 = pneg %p79
        $region22: #{tpu_custom_call.1} parent=15 // pred_check_branch
          %153 = sbr.rel (%p151) target = $region24
        $region23: #{tpu_custom_call.1} parent=15 // pred_region
          %s154 = sand.u32 %s69, 1
          %s155 = scalar_lea.sflag [#allocation6], %s154
          %s156 = sand.u32 %s69, 1
          %s157 = smul.addr %s156, 2
          %s158 = scalar_lea.vmem [#allocation5], %s157
          %s159 = smul.u32 2, %s25
          %s161 = ssub.s32 32, 32
          %162 = vsyncadd %s155, %s161
          %s163 = smul.addr %s24, 2
          %s164 = sadd.s32 %s159, %s163
          %s165 = smul.addr %s164, 16
          %s166 = scalar_lea.hbm %s1, %s165
          %s168 = sshll.u32 %s158, 4
          %s169 = int_to_ptr.vmem [resolvable:$true] %s168
          %171 = dma.hbm_to_vmem [thread:$0]  %s166, 32, %s169, %s155
        $region24: #{tpu_custom_call.1} parent=15 // pred_fallthru
          _
      $region16: #{tpu_custom_call.1} parent=5 // pred_fallthru
        _
      %p172 = scmp.le.s32.totalorder 1, %s17
      %p173 = scmp.lt.s32.totalorder %s17, 3
      %p174 = pnand %p172, %p173
      %p175 = pneg %p174
      // Predicated region
      $region25: #{tpu_custom_call.1} parent=5 // pred_check
        _
      $region26: #{tpu_custom_call.1} parent=5 // pred_check_branch
        %177 = sbr.rel (%p174) target = $region28
      $region27: #{tpu_custom_call.1} parent=5 // pred_region
        %s178 = ssub.s32 %s17, 1
        %s179 = sand.u32 %s44, 1
        %s180 = scalar_lea.sflag [#allocation3], %s179
        %s181 = sand.u32 %s44, 1
        %s182 = smul.addr %s181, 8
        %s183 = scalar_lea.vmem [#allocation2], %s182
        // Predicated region
        $region29: #{tpu_custom_call.1} parent=27 // pred_check
          %p184 = pneg %p57
        $region30: #{tpu_custom_call.1} parent=27 // pred_check_branch
          %186 = sbr.rel (%p184) target = $region32
        $region31: #{tpu_custom_call.1} parent=27 // pred_region
          %187 = dma.done %s180, 128
        $region32: #{tpu_custom_call.1} parent=27 // pred_fallthru
          _
        %s188 = sand.u32 %s72, 1
        %s189 = scalar_lea.sflag [#allocation6], %s188
        %s190 = sand.u32 %s72, 1
        %s191 = smul.addr %s190, 2
        %s192 = scalar_lea.vmem [#allocation5], %s191
        // Predicated region
        $region33: #{tpu_custom_call.1} parent=27 // pred_check
          %p193 = pneg %p85
        $region34: #{tpu_custom_call.1} parent=27 // pred_check_branch
          %195 = sbr.rel (%p193) target = $region36
        $region35: #{tpu_custom_call.1} parent=27 // pred_region
          %196 = dma.done %s189, 32
        $region36: #{tpu_custom_call.1} parent=27 // pred_fallthru
          _
        %s197 = sand.u32 %s44, 1
        %s198 = scalar_lea.sflag [#allocation3], %s197
        %s199 = sand.u32 %s44, 1
        %s200 = smul.addr %s199, 8
        %s201 = scalar_lea.vmem [#allocation2], %s200
        %p202 = pneg %p57
        %p203 = pneg %p54
        %s204 = sand.u32 %s72, 1
        %s205 = scalar_lea.sflag [#allocation6], %s204
        %s206 = sand.u32 %s72, 1
        %s207 = smul.addr %s206, 2
        %s208 = scalar_lea.vmem [#allocation5], %s207
        %p209 = pneg %p85
        %p210 = pneg %p82
        %p211 = pneg %p111
        %p212 = pneg %p108
        %s213 = sand.u32 %s98, 1
        %s214 = scalar_lea.sflag [#allocation4], %s213
        %s215 = sand.u32 %s98, 1
        %s216 = smul.addr %s215, 4
        %s217 = scalar_lea.vmem [#allocation7], %s216
        %s218 = smul.u32 2, %s27
        %s219 = smul.u32 2, %s27
        %p221 = scmp.eq.s32.totalorder %s27, 0
        // Predicated region
        $region37: #{tpu_custom_call.1} parent=27 // pred_check
          %p222 = pneg %p221
        $region38: #{tpu_custom_call.1} parent=27 // pred_check_branch
          %224 = sbr.rel (%p222) target = $region40
        $region39: #{tpu_custom_call.1} parent=27 // pred_region
          %vm225 = vcmask 27648
          %226 = vst.msk [vmem:[%s217] sm:$0xf] %vm225, 0.0
        $region40: #{tpu_custom_call.1} parent=27 // pred_fallthru
          _
        %v227 = vld [vmem:[%s183] sm:$0xff]
        %v228 = vld [vmem:[%s192] sm:$0x3]
        %v229 = vlaneseq
        %v230 = vshrl.u32 %v229, 7
        %v232 = vcombine.high %v227, %v227
        %vm234 = vcmask 1043456
        %v235 = vsel %vm234, %v227, -inf
        %v236 = vrot.slane %v235, 4
        %v237 = vmax.f32 %v235, %v236
        %v238 = vrot.slane %v237, 2
        %v239 = vmax.f32 %v237, %v238
        %v240 = vrot.slane %v239, 1
        %v241 = vmax.f32 %v239, %v240
        %v242 = vsel %vm234, %v232, -inf
        %v243 = vrot.slane %v242, 4
        %v244 = vmax.f32 %v242, %v243
        %v245 = vrot.slane %v244, 2
        %v246 = vmax.f32 %v244, %v245
        %v247 = vrot.slane %v246, 1
        %v248 = vmax.f32 %v246, %v247
        %v251 = vcombine.low %v241, %v248
        %vm253 = vcmp.eq.f32.partialorder %v227, %v251
        %v255 = vunpack.c.l.s4 839922192
        %v256 = vunpack.c.0.s8 %v255
        %v257 = vlaneseq
        %v258 = vshrl.u32 %v257, 7
        %v259 = vsub.s32 %v256, %v258
        %v260 = vrot.slane %v230, %v259
        %v261 = vsel %vm253, %v260, 4
        %v262 = vcombine.high %v261, %v261
        %v263 = vsel %vm234, %v261, 2147483647
        %v264 = vrot.slane %v263, 4
        %vm265 = vcmp.lt.s32.totalorder %v263, %v264
        %v266 = vsel %vm265, %v263, %v264
        %v267 = vrot.slane %v266, 2
        %vm268 = vcmp.lt.s32.totalorder %v266, %v267
        %v269 = vsel %vm268, %v266, %v267
        %v270 = vrot.slane %v269, 1
        %vm271 = vcmp.lt.s32.totalorder %v269, %v270
        %v272 = vsel %vm271, %v269, %v270
        %v273 = vsel %vm234, %v262, 2147483647
        %v274 = vrot.slane %v273, 4
        %vm275 = vcmp.lt.s32.totalorder %v273, %v274
        %v276 = vsel %vm275, %v273, %v274
        %v277 = vrot.slane %v276, 2
        %vm278 = vcmp.lt.s32.totalorder %v276, %v277
        %v279 = vsel %vm278, %v276, %v277
        %v280 = vrot.slane %v279, 1
        %vm281 = vcmp.lt.s32.totalorder %v279, %v280
        %v282 = vsel %vm281, %v279, %v280
        %vm283 = vcmp.eq.s32.totalorder %v230, %v272
        %vm284 = vcmp.eq.s32.totalorder %v230, %v282
        %v285 = vsel %vm283, 1, 0
        %v286 = vsel %vm284, 1, 0
        %v287 = vcvt.s32.f32 %v285
        %v288 = vcvt.s32.f32 %v286
        %v289 = vpack.c.bf16 %v287, %v287
        %v290 = vpack.c.bf16 %v288, %v288
        %v291 = vlaneseq
        %v292 = vshrl.u32 %v291, 7
        %v293 = vsub.s32 0, %v292
        %v294 = vrot.slane %v228, %v293
        %v295 = vlaneseq
        %v296 = vshrl.u32 %v295, 7
        %v297 = vsub.s32 1, %v296
        %v298 = vrot.slane %v228, %v297
        %vm299 = vcmp.eq.s32.totalorder %v230, %v294
        %vm300 = vcmp.eq.s32.totalorder %v230, %v298
        %v301 = vsel %vm299, 1, 0
        %v302 = vsel %vm300, 1, 0
        %v303 = vcvt.s32.f32 %v301
        %v304 = vcvt.s32.f32 %v302
        %v305 = vpack.c.bf16 %v303, %v303
        %v306 = vpack.c.bf16 %v304, %v304
        %v307 = vld [vmem:[%s217] sm:$0xf]
        %308 = vmatprep.subr.bf16.mxu0 0
        %309 = vmatpush1.bf16.xpose.msra.mxu0 0
        %310 = vmatprep.subr.bf16.mxu0 0
        %311 = vmatpush1.bf16.xpose.msra.mxu0 0
        %312 = vmatprep.subr.bf16.mxu0 0
        %313 = vmatpush1.bf16.xpose.msra.mxu0 0
        %314 = vmatprep.subr.bf16.mxu0 0
        %315 = vmatpush1.bf16.xpose.msra.mxu0 0
        %316 = vmatprep.subr.bf16.mxu0 0
        %317 = vmatpush1.bf16.xpose.msra.mxu0 0
        %318 = vmatprep.subr.bf16.mxu0 0
        %319 = vmatpush1.bf16.xpose.msra.mxu0 0
        %320 = vmatprep.subr.bf16.mxu0 0
        %321 = vmatpush1.bf16.xpose.msra.mxu0 0
        %322 = vmatprep.subr.bf16.mxu0 %v306
        %323 = vmatpush1.bf16.xpose.msra.mxu0 %v305
        %324 = vmatprep.subr.bf16.mxu0 0
        %325 = vmatpush2.bf16.xpose.msra.mxu0 0
        %326 = vmatprep.subr.bf16.mxu0 0
        %327 = vmatpush2.bf16.xpose.msra.mxu0 0
        %328 = vmatprep.subr.bf16.mxu0 0
        %329 = vmatpush2.bf16.xpose.msra.mxu0 0
        %330 = vmatprep.subr.bf16.mxu0 0
        %331 = vmatpush2.bf16.xpose.msra.mxu0 0
        %332 = vmatprep.subr.bf16.mxu0 0
        %333 = vmatpush2.bf16.xpose.msra.mxu0 0
        %334 = vmatprep.subr.bf16.mxu0 0
        %335 = vmatpush2.bf16.xpose.msra.mxu0 0
        %336 = vmatprep.subr.bf16.mxu0 0
        %337 = vmatpush2.bf16.xpose.msra.mxu0 0
        %338 = vmatprep.subr.bf16.mxu0 0
        %339 = vmatpush2.bf16.xpose.msra.mxu0 0
        %340 = vmatprep.mubr.bf16.mxu0 %v290
        %341 = vmatmul.mubr.bf16.gmra.mxu0 %v289
        %v342 = vpop.f32.mrf.mxu0
        %v343 = vadd.f32 0.0, %v342
        %v344 = vpop.f32.mrf.mxu0
        %v345 = vpop.f32.mrf.mxu0
        %v346 = vpop.f32.mrf.mxu0
        %347 = vdwg.mxu0
        %v348 = vadd.f32 %v307, %v343
        %vm349 = vcmask 27648
        %350 = vst.msk [vmem:[%s217] sm:$0xf] %vm349, %v348
        %s351 = sand.u32 %s98, 1
        %s352 = scalar_lea.sflag [#allocation4], %s351
        %s353 = sand.u32 %s98, 1
        %s354 = smul.addr %s353, 4
        %s355 = scalar_lea.vmem [#allocation7], %s354
        // Predicated region
        $region41: #{tpu_custom_call.1} parent=27 // pred_check
          %p356 = pneg %p108
        $region42: #{tpu_custom_call.1} parent=27 // pred_check_branch
          %358 = sbr.rel (%p356) target = $region44
        $region43: #{tpu_custom_call.1} parent=27 // pred_region
          %s360 = ssub.s32 64, 64
          %361 = vsyncadd %s352, %s360
          %s362 = smul.addr %s26, 64
          %s363 = scalar_lea.hbm %s2, %s362
          %s365 = sshll.u32 %s355, 4
          %s366 = int_to_ptr.vmem [resolvable:$true] %s365
          %368 = dma.vmem_to_hbm [thread:$0]  %s366, 64, %s363, %s352
        $region44: #{tpu_custom_call.1} parent=27 // pred_fallthru
          _
      $region28: #{tpu_custom_call.1} parent=5 // pred_fallthru
        _
      %p369 = scmp.le.s32.totalorder 2, %s17
      // Predicated region
      $region45: #{tpu_custom_call.1} parent=5 // pred_check
        %p370 = pneg %p369
      $region46: #{tpu_custom_call.1} parent=5 // pred_check_branch
        %372 = sbr.rel (%p370) target = $region48
      $region47: #{tpu_custom_call.1} parent=5 // pred_region
        %s373 = ssub.s32 %s17, 2
        // Predicated region
        $region49: #{tpu_custom_call.1} parent=47 // pred_check
          %p374 = pneg %p114
        $region50: #{tpu_custom_call.1} parent=47 // pred_check_branch
          %376 = sbr.rel (%p374) target = $region52
        $region51: #{tpu_custom_call.1} parent=47 // pred_region
          %s377 = sand.u32 %s99, 1
          %s378 = scalar_lea.sflag [#allocation4], %s377
          %s379 = sand.u32 %s99, 1
          %s380 = smul.addr %s379, 4
          %s381 = scalar_lea.vmem [#allocation7], %s380
          %382 = dma.done %s378, 64
        $region52: #{tpu_custom_call.1} parent=47 // pred_fallthru
          _
      $region48: #{tpu_custom_call.1} parent=5 // pred_fallthru
        _
    $region6: #{tpu_custom_call.1} parent=1 // loop_footer
      %s21 = sadd.s32 1, %s17
    $region7: #{tpu_custom_call.1} parent=1 // loop_footer_branch
      %16 = sbr.rel target = $region3
    $region8: #{tpu_custom_call.1} parent=1 // loop_exit
      _
    %383 = vsyncpa [#allocation3], 1
    %s384 = scalar_lea.sflag [#allocation3], 1
    %385 = vsyncpa %s384, 1
    %386 = vsyncpa [#allocation6], 1
    %s387 = scalar_lea.sflag [#allocation6], 1
    %388 = vsyncpa %s387, 1
    %389 = vsyncpa [#allocation4], 1
    %s390 = scalar_lea.sflag [#allocation4], 1
    %391 = vsyncpa %s390, 1

</llo_original>
